<compile_context>
chip_gen: v5e
topology: v5e:2x2
jax: 0.10.0
libtpu: 0.0.40
codegen_flags: <defaults>
</compile_context>

<pallas_src>
import jax
import jax.numpy as jnp
from jax.experimental import pallas as pl
from jax.experimental.pallas import tpu as pltpu


def basicnn_fwd_kernel(params_ref, x_ref, o_ref):
    # params_ref lives in SMEM: [w00, b00, w01, w10, b10, w11, final_bias]
    w00 = params_ref[0]
    b00 = params_ref[1]
    w01 = params_ref[2]
    w10 = params_ref[3]
    b10 = params_ref[4]
    w11 = params_ref[5]
    final_bias = params_ref[6]

    x = x_ref[...]
    if x.dtype != jnp.float32:
        x = x.astype(jnp.float32)

    top = jnp.maximum(x * w00 + b00, 0.0) * w01
    bot = jnp.maximum(x * w10 + b10, 0.0) * w11
    out = jnp.maximum(top + bot + final_bias, 0.0)

    o_ref[...] = out.astype(o_ref.dtype)


def _round_up(a, b):
    return ((a + b - 1) // b) * b


def basic_nn_train_forward(x, params, *, out_dtype=None, block_rows=None):
    """Forward pass of BasicNN_train (elementwise), any input shape.

    x:      float array of any shape ("dosage" values).
    params: 7 floats = [w00, b00, w01, w10, b10, w11, final_bias].
    Returns an array with x's shape in `out_dtype` (defaults to x.dtype so
    numerics match the f32 PyTorch module).
    """
    if out_dtype is None:
        out_dtype = x.dtype
    orig_shape = x.shape
    n = int(x.size)
    if n == 0:
        return jnp.zeros(orig_shape, out_dtype)

    in_bytes = jnp.dtype(x.dtype).itemsize
    out_bytes = jnp.dtype(out_dtype).itemsize

    # Lane-dense layout: pick the largest lane width (multiple of 128) that
    # divides numel so the reshape is free (no pad / slice HBM sweeps).
    lane = next((c for c in (4096, 2048, 1024, 512, 256, 128) if n % c == 0), 0)
    pad = 0
    if lane == 0:
        # Only when numel is not a multiple of 128: one pad + one slice pass.
        lane = 128
        pad = (-n) % lane
    rows = (n + pad) // lane

    x_flat = x.reshape(-1)
    if pad:
        x_flat = jnp.pad(x_flat, (0, pad))
    x2 = x_flat.reshape(rows, lane)

    if block_rows is None:
        # ~4 MiB of input per block; (in + out) x 2 buffers <= ~32 MiB even
        # for f32 in/out, comfortably inside every generation's VMEM.
        target_bytes = 4 * 1024 * 1024
        block_rows = max(8, target_bytes // (lane * in_bytes))
        # Keep >= ~8 grid steps so double-buffered DMA overlaps compute and
        # both v7x TensorCores get a balanced share.
        block_rows = min(block_rows, max(8, _round_up(pl.cdiv(rows, 8), 8)))
    block_rows = int(min(block_rows, rows))
    if rows >= 8:
        block_rows = max(8, (block_rows // 8) * 8)
    else:
        block_rows = rows  # full-extent block is allowed by the (8,128) rule

    grid = (pl.cdiv(rows, block_rows),)

    params_f32 = jnp.asarray(params, dtype=jnp.float32).reshape(7)

    out2 = pl.pallas_call(
        basicnn_fwd_kernel,
        out_shape=jax.ShapeDtypeStruct((rows, lane), out_dtype),
        grid=grid,
        in_specs=[
            # 7 scalar params, whole array in SMEM.
            pl.BlockSpec(memory_space=pltpu.MemorySpace.SMEM),
            # Row-tiled, lane-dense activation slab (default Buffered(2)).
            pl.BlockSpec((block_rows, lane), lambda i: (i, 0)),
        ],
        out_specs=pl.BlockSpec((block_rows, lane), lambda i: (i, 0)),
        compiler_params=pltpu.CompilerParams(
            dimension_semantics=("parallel",),
            vmem_limit_bytes=48 * 1024 * 1024,
        ),
        cost_estimate=pl.CostEstimate(
            flops=11 * n,
            transcendentals=0,
            bytes_accessed=n * (in_bytes + out_bytes),
        ),
    )(params_f32, x2)

    out_flat = out2.reshape(-1)
    if pad:
        out_flat = out_flat[:n]
    return out_flat.reshape(orig_shape)


def reference_forward(x, params):
    w00, b00, w01, w10, b10, w11, final_bias = [params[i] for i in range(7)]
    top = jnp.maximum(x * w00 + b00, 0.0) * w01
    bot = jnp.maximum(x * w10 + b10, 0.0) * w11
    return jnp.maximum(top + bot + final_bias, 0.0)


if __name__ == "__main__":
    # Parameter init matching BasicNN_train.__init__
    params = jnp.array([1.7, -0.85, -40.8, 12.6, 0.0, 2.7, 0.0],
                       dtype=jnp.float32)

    key = jax.random.PRNGKey(0)
    k0, k1, k2 = jax.random.split(key, 3)

    # Small "dosage"-like inputs in [0, 1]:
    #  * x_small  : arbitrary 4-D shape, single-block path.
    #  * x_ragged : numel not a multiple of 128, exercises the pad fallback.
    #  * x_tiled  : exercises the multi-step parallel grid (grid=4).
    cases = [
        jax.random.uniform(k0, (2, 4, 16, 16), dtype=jnp.float32),
        jax.random.uniform(k1, (1000,), dtype=jnp.float32),
        jax.random.uniform(k2, (256, 512), dtype=jnp.float32),
    ]

    for x in cases:
        out = jax.block_until_ready(basic_nn_train_forward(x, params))
        ref = reference_forward(x, params)
        assert out.shape == x.shape and out.dtype == x.dtype
        assert jnp.allclose(out, ref, atol=1e-5, rtol=1e-5)

    print("KERNEL_OK")
</pallas_src>

<mosaic_0001>
module attributes {stable_mosaic.version = 11 : i64} {
  func.func @basicnn_fwd_kernel(%arg0: i32, %arg1: memref<7xf32, #tpu.memory_space<smem>>, %arg2: memref<1x2048xf32, #tpu.memory_space<vmem>>, %arg3: memref<1x2048xf32, #tpu.memory_space<vmem>>) attributes {dimension_semantics = [#tpu.dimension_semantics<parallel>], iteration_bounds = array<i64: 1>, scalar_prefetch = 0 : i64, scratch_operands = 0 : i64, tpu.core_type = #tpu.core_type<tc>, window_params = [{transform_indices = @transform_0, window_bounds = array<i64: 7>}, {transform_indices = @transform_1, window_bounds = array<i64: 1, 2048>}, {transform_indices = @transform_2, window_bounds = array<i64: 1, 2048>}]} {
    %c0 = arith.constant 0 : index
    %0 = memref.load %arg1[%c0] : memref<7xf32, #tpu.memory_space<smem>>
    %c1 = arith.constant 1 : index
    %1 = memref.load %arg1[%c1] : memref<7xf32, #tpu.memory_space<smem>>
    %c2 = arith.constant 2 : index
    %2 = memref.load %arg1[%c2] : memref<7xf32, #tpu.memory_space<smem>>
    %c3 = arith.constant 3 : index
    %3 = memref.load %arg1[%c3] : memref<7xf32, #tpu.memory_space<smem>>
    %c4 = arith.constant 4 : index
    %4 = memref.load %arg1[%c4] : memref<7xf32, #tpu.memory_space<smem>>
    %c5 = arith.constant 5 : index
    %5 = memref.load %arg1[%c5] : memref<7xf32, #tpu.memory_space<smem>>
    %c6 = arith.constant 6 : index
    %6 = memref.load %arg1[%c6] : memref<7xf32, #tpu.memory_space<smem>>
    %c0_0 = arith.constant 0 : index
    %c0_1 = arith.constant 0 : index
    %7 = vector.load %arg2[%c0_0, %c0_1] : memref<1x2048xf32, #tpu.memory_space<vmem>>, vector<1x2048xf32>
    %8 = vector.broadcast %0 : f32 to vector<1x2048xf32>
    %9 = arith.mulf %7, %8 : vector<1x2048xf32>
    %10 = vector.broadcast %1 : f32 to vector<1x2048xf32>
    %11 = arith.addf %9, %10 : vector<1x2048xf32>
    %cst = arith.constant 0.000000e+00 : f32
    %12 = vector.broadcast %cst : f32 to vector<1x2048xf32>
    %13 = arith.maximumf %11, %12 : vector<1x2048xf32>
    %14 = vector.broadcast %2 : f32 to vector<1x2048xf32>
    %15 = arith.mulf %13, %14 : vector<1x2048xf32>
    %16 = vector.broadcast %3 : f32 to vector<1x2048xf32>
    %17 = arith.mulf %7, %16 : vector<1x2048xf32>
    %18 = vector.broadcast %4 : f32 to vector<1x2048xf32>
    %19 = arith.addf %17, %18 : vector<1x2048xf32>
    %cst_2 = arith.constant 0.000000e+00 : f32
    %20 = vector.broadcast %cst_2 : f32 to vector<1x2048xf32>
    %21 = arith.maximumf %19, %20 : vector<1x2048xf32>
    %22 = vector.broadcast %5 : f32 to vector<1x2048xf32>
    %23 = arith.mulf %21, %22 : vector<1x2048xf32>
    %24 = arith.addf %15, %23 : vector<1x2048xf32>
    %25 = vector.broadcast %6 : f32 to vector<1x2048xf32>
    %26 = arith.addf %24, %25 : vector<1x2048xf32>
    %cst_3 = arith.constant 0.000000e+00 : f32
    %27 = vector.broadcast %cst_3 : f32 to vector<1x2048xf32>
    %28 = arith.maximumf %26, %27 : vector<1x2048xf32>
    %c0_4 = arith.constant 0 : index
    %c0_5 = arith.constant 0 : index
    %29 = vector.load %arg3[%c0_4, %c0_5] : memref<1x2048xf32, #tpu.memory_space<vmem>>, vector<1x2048xf32>
    tpu.vector_store %arg3[%c0_4, %c0_5], %28 {strides = array<i32>} : memref<1x2048xf32, #tpu.memory_space<vmem>>, vector<1x2048xf32>,
    return
  }
  func.func @transform_0(%arg0: i32) -> i32 {
    %c0_i32 = arith.constant 0 : i32
    %c0_i32_0 = arith.constant 0 : i32
    return %c0_i32 : i32
  }
  func.func @transform_1(%arg0: i32) -> (i32, i32) {
    %c0_i32 = arith.constant 0 : i32
    %c0_i32_0 = arith.constant 0 : i32
    return %arg0, %c0_i32 : i32, i32
  }
  func.func @transform_2(%arg0: i32) -> (i32, i32) {
    %c0_i32 = arith.constant 0 : i32
    %c0_i32_0 = arith.constant 0 : i32
    return %arg0, %c0_i32 : i32, i32
  }
}

</mosaic_0001>

<llo_original>
// kernel: tpu_custom_call.1
$region0: #{tpu_custom_call.1}
  #allocation0 [shape = 'u32[]', space=smem, size = 0x4, offset = 0x4, fixed_abs, tag = 'smem constant byte address 0x4 - core index']
  #allocation1 [shape = 'u32[72,128]{1,0:T(1,128)}', space=vmem, size = 0x9000, scoped, tag = 'internal scratch']
  %s0 = inlined_call_operand.hbm [shape: f32[7], index: 0, kind: input, shape index: {}]
  %s1 = inlined_call_operand.hbm [shape: f32[1,2048], index: 1, kind: input, shape index: {}]
  %s2 = inlined_call_operand.hbm [shape: f32[1,2048], index: 2, kind: output, shape index: {}]
  %s3 = sld [smem:[#allocation0]]
  $region26: #{tpu_custom_call.1} parent=0
    _
  %s5 = ssub.s32 1, %s3
  %s6 = scalar_select 0, %s5, %s3
  $region1: #{tpu_custom_call.1} parent=0
    #allocation2 [shape = 'u8[512]{0}', space=smem, size = 0x200, scoped, tag = 'input window, operand 0, single buffered']
    #allocation3 [shape = 's32[1]{0}', space=sflag, size = 0x4, scoped, tag = 'scoped memory for tpu_custom_call.1']
    #allocation4 [shape = 's32[1]{0}', space=sflag, size = 0x4, scoped, tag = 'scoped memory for tpu_custom_call.1']
    #allocation5 [shape = 's32[1]{0}', space=sflag, size = 0x4, scoped, tag = 'scoped memory for tpu_custom_call.1']
    #allocation6 [shape = 'u8[8192]{0}', space=vmem, size = 0x2000, scoped, tag = 'input window, operand 1, single buffered']
    #allocation7 [shape = 'u8[8192]{0}', space=vmem, size = 0x2000, scoped, tag = 'output window, operand 0, single buffered']
    %7 = vsyncpa [#allocation5], 0
    %8 = vsyncpa [#allocation3], 0
    %9 = vsyncpa [#allocation4], 0
    // Predicated region
    $region2: #{tpu_custom_call.1} parent=1 // pred_check
      _
    $region3: #{tpu_custom_call.1} parent=1 // pred_check_branch
      %11 = sbr.rel (0) target = $region5
    $region4: #{tpu_custom_call.1} parent=1 // pred_region
      %13 = vsyncadd [#allocation5], 0
      %s15 = sshll.u32 %s0, 4
      %s16 = int_to_ptr.hbm [resolvable:$true] %s15
      %18 = dma.hbm_to_smem %s16, 16, [#allocation2], [#allocation5]
    $region5: #{tpu_custom_call.1} parent=1 // pred_fallthru
      _
    // Predicated region
    $region6: #{tpu_custom_call.1} parent=1 // pred_check
      _
    $region7: #{tpu_custom_call.1} parent=1 // pred_check_branch
      %20 = sbr.rel (0) target = $region9
    $region8: #{tpu_custom_call.1} parent=1 // pred_region
      %22 = vsyncadd [#allocation3], 0
      %s24 = sshll.u32 %s1, 4
      %s25 = int_to_ptr.hbm [resolvable:$true] %s24
      %s26 = sshll.u32 [#allocation6], 4
      %s27 = int_to_ptr.vmem [resolvable:$true] %s26
      %29 = dma.hbm_to_vmem [thread:$0]  %s25, 256, %s27, [#allocation3]
    $region9: #{tpu_custom_call.1} parent=1 // pred_fallthru
      _
    // Predicated region
    $region10: #{tpu_custom_call.1} parent=1 // pred_check
      _
    $region11: #{tpu_custom_call.1} parent=1 // pred_check_branch
      %31 = sbr.rel (0) target = $region13
    $region12: #{tpu_custom_call.1} parent=1 // pred_region
      %33 = dma.done [#allocation5], 16
    $region13: #{tpu_custom_call.1} parent=1 // pred_fallthru
      _
    // Predicated region
    $region14: #{tpu_custom_call.1} parent=1 // pred_check
      _
    $region15: #{tpu_custom_call.1} parent=1 // pred_check_branch
      %35 = sbr.rel (0) target = $region17
    $region16: #{tpu_custom_call.1} parent=1 // pred_region
      %37 = dma.done [#allocation3], 256
    $region17: #{tpu_custom_call.1} parent=1 // pred_fallthru
      _
    %38 = sfence
    %s39 = sld [smem:[#allocation2]]
    %s40 = sld [smem:[#allocation2 + $0x1]]
    %s41 = sld [smem:[#allocation2 + $0x2]]
    %s42 = sld [smem:[#allocation2 + $0x3]]
    %s43 = sld [smem:[#allocation2 + $0x4]]
    %s44 = sld [smem:[#allocation2 + $0x5]]
    %s45 = sld [smem:[#allocation2 + $0x6]]
    %v46 = vld [vmem:[#allocation6] sm:$0xff]
    %v47 = vld [vmem:[#allocation6 + $0x8] sm:$0xff]
    %v48 = vstv %s39
    %v49 = vmul.f32 %v46, %v48
    %v50 = vmul.f32 %v47, %v48
    %v51 = vstv %s40
    %v52 = vadd.f32 %v49, %v51
    %v53 = vadd.f32 %v50, %v51
    %v54 = vmax.f32 %v52, 0.0
    %v55 = vmax.f32 %v53, 0.0
    %v56 = vstv %s41
    %v57 = vmul.f32 %v54, %v56
    %v58 = vmul.f32 %v55, %v56
    %v59 = vstv %s42
    %v60 = vmul.f32 %v46, %v59
    %v61 = vmul.f32 %v47, %v59
    %v62 = vstv %s43
    %v63 = vadd.f32 %v60, %v62
    %v64 = vadd.f32 %v61, %v62
    %v65 = vmax.f32 %v63, 0.0
    %v66 = vmax.f32 %v64, 0.0
    %v67 = vstv %s44
    %v68 = vmul.f32 %v65, %v67
    %v69 = vmul.f32 %v66, %v67
    %v70 = vadd.f32 %v57, %v68
    %v71 = vadd.f32 %v58, %v69
    %v72 = vstv %s45
    %v73 = vadd.f32 %v70, %v72
    %v74 = vadd.f32 %v71, %v72
    %v75 = vmax.f32 %v73, 0.0
    %v76 = vmax.f32 %v74, 0.0
    %77 = vst [vmem:[#allocation7] sm:$0xff] %v75
    %78 = vst [vmem:[#allocation7 + $0x8] sm:$0xff] %v76
    // Predicated region
    $region18: #{tpu_custom_call.1} parent=1 // pred_check
      _
    $region19: #{tpu_custom_call.1} parent=1 // pred_check_branch
      %80 = sbr.rel (0) target = $region21
    $region20: #{tpu_custom_call.1} parent=1 // pred_region
      %82 = vsyncadd [#allocation4], 0
      %s84 = sshll.u32 [#allocation7], 4
      %s85 = int_to_ptr.vmem [resolvable:$true] %s84
      %s86 = sshll.u32 %s2, 4
      %s87 = int_to_ptr.hbm [resolvable:$true] %s86
      %89 = dma.vmem_to_hbm [thread:$0]  %s85, 256, %s87, [#allocation4]
    $region21: #{tpu_custom_call.1} parent=1 // pred_fallthru
      _
    // Predicated region
    $region22: #{tpu_custom_call.1} parent=1 // pred_check
      _
    $region23: #{tpu_custom_call.1} parent=1 // pred_check_branch
      %91 = sbr.rel (0) target = $region25
    $region24: #{tpu_custom_call.1} parent=1 // pred_region
      %93 = dma.done [#allocation4], 256
    $region25: #{tpu_custom_call.1} parent=1 // pred_fallthru
      _
    %94 = vsyncpa [#allocation3], 1
    %95 = vsyncpa [#allocation4], 1
    %96 = vsyncpa [#allocation5], 1

</llo_original>
